<compile_context>
chip_gen: v5e
topology: v5e:2x2
jax: 0.10.0
libtpu: 0.0.40
codegen_flags: <defaults>
</compile_context>

<pallas_src>
import math

import jax
import jax.numpy as jnp
from jax import lax
from jax.experimental import pallas as pl
from jax.experimental.pallas import tpu as pltpu


def _self_attention_kernel(embedding_size, no_of_heads):
    head_size = embedding_size // no_of_heads

    def kernel(q_ref, k_ref, v_ref, bias_ref,
               wq_ref, wk_ref, wv_ref, wo_ref, bo_ref,
               o_ref, concat_ref):
        q = q_ref[0]              # (Q, E)
        k = k_ref[0]              # (K, E)
        v = v_ref[0]              # (V, E)
        bias = bias_ref[0, 0]     # (Q, K) additive mask: -inf where masked

        # Lane-dense projections: one (L, E) @ (E, E) matmul each.  Weights
        # are block-diagonal kron(I_H, w.T); wq also carries 1/sqrt(E).
        qh = jnp.dot(q, wq_ref[...], preferred_element_type=jnp.float32)   # (Q, E)
        kh = jnp.dot(k, wk_ref[...], preferred_element_type=jnp.float32)   # (K, E)

        # Literal 'nhqk,nvhd->nqhd' only needs sum_v(values); project the
        # sequence-sum: (1, E) @ (E, E).
        v_sum = jnp.sum(v, axis=0, keepdims=True)                          # (1, E)
        vh_colsum = jnp.dot(v_sum, wv_ref[...],
                            preferred_element_type=jnp.float32)            # (1, E)

        # Per-head energy -> softmax -> row-sum (row-sums are ~1 by
        # construction, but kept for exact forward semantics, incl. NaN on
        # fully-masked rows).  Results go straight into a (Q, E) VMEM scratch
        # at static lane offsets — no list + concatenate.
        for h in range(no_of_heads):
            lo = h * head_size
            hi = lo + head_size
            # energy[q, k] = sum_d qh[q, d] * kh[k, d]  (no in-kernel .T)
            energy = lax.dot_general(
                qh[:, lo:hi], kh[:, lo:hi],
                dimension_numbers=(((1,), (1,)), ((), ())),
                preferred_element_type=jnp.float32)                        # (Q, K)
            att = jax.nn.softmax(energy + bias, axis=-1)                   # (Q, K)
            att_rowsum = jnp.sum(att, axis=-1, keepdims=True)              # (Q, 1)
            concat_ref[:, lo:hi] = att_rowsum * vh_colsum[:, lo:hi]        # (Q, d)

        # fc_out: (Q, E) @ (E, E) + bias  (wo pre-transposed in the wrapper).
        out = jnp.dot(concat_ref[...], wo_ref[...],
                      preferred_element_type=jnp.float32) + bo_ref[...]
        o_ref[0] = out.astype(o_ref.dtype)

    return kernel


def self_attention_pallas(q, k, v, mask, params, embedding_size, no_of_heads):
    """q,k,v: (N, L, E) float32; mask: (N, 1, Q, K) float32 (0 = masked)."""
    N, q_len, E = q.shape
    k_len = k.shape[1]
    v_len = v.shape[1]
    assert E == embedding_size

    H = no_of_heads

    # ---- wrapper-side layout / algebra plumbing (done once, in XLA) --------
    eye_h = jnp.eye(H, dtype=jnp.float32)
    # Block-diagonal, pre-transposed projection weights; the 1/sqrt(E) scale
    # is folded into the query weights (masked lanes still end up -inf).
    wq_bd_t = jnp.kron(eye_h, params["wq"].T) * (1.0 / math.sqrt(E))
    wk_bd_t = jnp.kron(eye_h, params["wk"].T)
    wv_bd_t = jnp.kron(eye_h, params["wv"].T)
    wo_t = params["wo"].T
    # Additive mask bias: hoists the `mask == 0` compare out of the kernel.
    # NOTE: at realistic seq lengths pass this as int8/bool (or iota-generate
    # a causal mask in-kernel) and tile q_len/k_len on extra grid axes.
    bias = jnp.where(mask == 0, -jnp.inf, 0.0).astype(jnp.float32)

    kernel = _self_attention_kernel(embedding_size, no_of_heads)

    grid_spec = pltpu.PrefetchScalarGridSpec(
        num_scalar_prefetch=0,
        grid=(N,),
        in_specs=[
            pl.BlockSpec((1, q_len, E), lambda n: (n, 0, 0)),
            pl.BlockSpec((1, k_len, E), lambda n: (n, 0, 0)),
            pl.BlockSpec((1, v_len, E), lambda n: (n, 0, 0)),
            pl.BlockSpec((1, 1, q_len, k_len), lambda n: (n, 0, 0, 0)),
            pl.BlockSpec((E, E), lambda n: (0, 0)),
            pl.BlockSpec((E, E), lambda n: (0, 0)),
            pl.BlockSpec((E, E), lambda n: (0, 0)),
            pl.BlockSpec((E, E), lambda n: (0, 0)),
            pl.BlockSpec((1, E), lambda n: (0, 0)),
        ],
        out_specs=pl.BlockSpec((1, q_len, E), lambda n: (n, 0, 0)),
        scratch_shapes=[pltpu.VMEM((q_len, E), jnp.float32)],
    )

    return pl.pallas_call(
        kernel,
        out_shape=jax.ShapeDtypeStruct((N, q_len, E), jnp.float32),
        grid_spec=grid_spec,
        compiler_params=pltpu.CompilerParams(
            dimension_semantics=("parallel",)),
    )(q, k, v, bias,
      wq_bd_t, wk_bd_t, wv_bd_t, wo_t, params["bo"])


def self_attention_ref(q, k, v, mask, params, embedding_size, no_of_heads):
    """Pure-JAX transcription of the PyTorch forward (for verification)."""
    N, q_len, E = q.shape
    k_len, v_len = k.shape[1], v.shape[1]
    H = no_of_heads
    d = E // H
    qh = q.reshape(N, q_len, H, d) @ params["wq"].T
    kh = k.reshape(N, k_len, H, d) @ params["wk"].T
    vh = v.reshape(N, v_len, H, d) @ params["wv"].T
    energy = jnp.einsum("nqhd,nkhd->nhqk", qh, kh)
    energy = jnp.where(mask == 0, -jnp.inf, energy)
    att = jax.nn.softmax(energy / math.sqrt(embedding_size), axis=3)
    out = jnp.einsum("nhqk,nvhd->nqhd", att, vh)        # literal (buggy) einsum
    out = out.reshape(N, q_len, H * d)
    return out @ params["wo"].T + params["bo"]


if __name__ == "__main__":
    # Small shapes consistent with the module.
    N, seq, embedding_size, no_of_heads = 2, 8, 32, 4
    d = embedding_size // no_of_heads

    key = jax.random.PRNGKey(0)
    ks = jax.random.split(key, 9)

    q = jax.random.normal(ks[0], (N, seq, embedding_size), jnp.float32)
    k = jax.random.normal(ks[1], (N, seq, embedding_size), jnp.float32)
    v = jax.random.normal(ks[2], (N, seq, embedding_size), jnp.float32)

    # Causal mask, broadcastable against (N, H, Q, K); every row has >= 1 valid key.
    mask = jnp.tril(jnp.ones((seq, seq), jnp.float32))[None, None].repeat(N, axis=0)

    # Deterministic parameter init (PyTorch-Linear-style uniform bounds).
    def uinit(rk, shape, fan_in):
        b = 1.0 / math.sqrt(fan_in)
        return jax.random.uniform(rk, shape, jnp.float32, minval=-b, maxval=b)

    params = {
        "wq": uinit(ks[3], (d, d), d),
        "wk": uinit(ks[4], (d, d), d),
        "wv": uinit(ks[5], (d, d), d),
        "wo": uinit(ks[6], (embedding_size, embedding_size), embedding_size),
        "bo": uinit(ks[7], (1, embedding_size), embedding_size),
    }

    out = self_attention_pallas(q, k, v, mask, params, embedding_size, no_of_heads)
    out = jax.block_until_ready(out)

    ref = self_attention_ref(q, k, v, mask, params, embedding_size, no_of_heads)
    assert out.shape == (N, seq, embedding_size)
    assert jnp.allclose(out, ref, atol=1e-4, rtol=1e-4), "mismatch vs reference"

    print("KERNEL_OK")
</pallas_src>

<mosaic_0001>
module attributes {stable_mosaic.version = 11 : i64} {
  func.func @kernel(%arg0: i32, %arg1: memref<1x8x32xf32, #tpu.memory_space<vmem>>, %arg2: memref<1x8x32xf32, #tpu.memory_space<vmem>>, %arg3: memref<1x8x32xf32, #tpu.memory_space<vmem>>, %arg4: memref<1x1x8x8xf32, #tpu.memory_space<vmem>>, %arg5: memref<32x32xf32, #tpu.memory_space<vmem>>, %arg6: memref<32x32xf32, #tpu.memory_space<vmem>>, %arg7: memref<32x32xf32, #tpu.memory_space<vmem>>, %arg8: memref<32x32xf32, #tpu.memory_space<vmem>>, %arg9: memref<1x32xf32, #tpu.memory_space<vmem>>, %arg10: memref<1x8x32xf32, #tpu.memory_space<vmem>>, %arg11: memref<8x32xf32, #tpu.memory_space<vmem>>) attributes {dimension_semantics = [#tpu.dimension_semantics<parallel>], iteration_bounds = array<i64: 2>, scalar_prefetch = 0 : i64, scratch_operands = 1 : i64, tpu.core_type = #tpu.core_type<tc>, window_params = [{transform_indices = @transform_0, window_bounds = array<i64: 1, 8, 32>}, {transform_indices = @transform_1, window_bounds = array<i64: 1, 8, 32>}, {transform_indices = @transform_2, window_bounds = array<i64: 1, 8, 32>}, {transform_indices = @transform_3, window_bounds = array<i64: 1, 1, 8, 8>}, {pipeline_mode = #tpu.pipeline_mode<synchronous>, transform_indices = @transform_4, window_bounds = array<i64: 32, 32>}, {pipeline_mode = #tpu.pipeline_mode<synchronous>, transform_indices = @transform_5, window_bounds = array<i64: 32, 32>}, {pipeline_mode = #tpu.pipeline_mode<synchronous>, transform_indices = @transform_6, window_bounds = array<i64: 32, 32>}, {pipeline_mode = #tpu.pipeline_mode<synchronous>, transform_indices = @transform_7, window_bounds = array<i64: 32, 32>}, {pipeline_mode = #tpu.pipeline_mode<synchronous>, transform_indices = @transform_8, window_bounds = array<i64: 1, 32>}, {transform_indices = @transform_9, window_bounds = array<i64: 1, 8, 32>}]} {
    %c0 = arith.constant 0 : index
    %c0_0 = arith.constant 0 : index
    %c0_1 = arith.constant 0 : index
    %0 = vector.load %arg1[%c0, %c0_0, %c0_1] : memref<1x8x32xf32, #tpu.memory_space<vmem>>, vector<1x8x32xf32>
    %1 = vector.shape_cast %0 : vector<1x8x32xf32> to vector<8x32xf32>
    %c0_2 = arith.constant 0 : index
    %c0_3 = arith.constant 0 : index
    %c0_4 = arith.constant 0 : index
    %2 = vector.load %arg2[%c0_2, %c0_3, %c0_4] : memref<1x8x32xf32, #tpu.memory_space<vmem>>, vector<1x8x32xf32>
    %3 = vector.shape_cast %2 : vector<1x8x32xf32> to vector<8x32xf32>
    %c0_5 = arith.constant 0 : index
    %c0_6 = arith.constant 0 : index
    %c0_7 = arith.constant 0 : index
    %4 = vector.load %arg3[%c0_5, %c0_6, %c0_7] : memref<1x8x32xf32, #tpu.memory_space<vmem>>, vector<1x8x32xf32>
    %5 = vector.shape_cast %4 : vector<1x8x32xf32> to vector<8x32xf32>
    %c0_8 = arith.constant 0 : index
    %c0_9 = arith.constant 0 : index
    %c0_10 = arith.constant 0 : index
    %c0_11 = arith.constant 0 : index
    %6 = vector.load %arg4[%c0_8, %c0_9, %c0_10, %c0_11] : memref<1x1x8x8xf32, #tpu.memory_space<vmem>>, vector<1x1x8x8xf32>
    %7 = vector.shape_cast %6 : vector<1x1x8x8xf32> to vector<8x8xf32>
    %c0_12 = arith.constant 0 : index
    %c0_13 = arith.constant 0 : index
    %8 = vector.load %arg5[%c0_12, %c0_13] : memref<32x32xf32, #tpu.memory_space<vmem>>, vector<32x32xf32>
    %cst = arith.constant dense<0.000000e+00> : vector<8x32xf32>
    %9 = tpu.matmul %1, %8, %cst {dimension_numbers = #tpu.dot_dimension_numbers<[1], [0], [0], [1], [0, 0, 1, 1], [], []>} : vector<8x32xf32>, vector<32x32xf32>, vector<8x32xf32> -> vector<8x32xf32>
    %c0_14 = arith.constant 0 : index
    %c0_15 = arith.constant 0 : index
    %10 = vector.load %arg6[%c0_14, %c0_15] : memref<32x32xf32, #tpu.memory_space<vmem>>, vector<32x32xf32>
    %cst_16 = arith.constant dense<0.000000e+00> : vector<8x32xf32>
    %11 = tpu.matmul %3, %10, %cst_16 {dimension_numbers = #tpu.dot_dimension_numbers<[1], [0], [0], [1], [0, 0, 1, 1], [], []>} : vector<8x32xf32>, vector<32x32xf32>, vector<8x32xf32> -> vector<8x32xf32>
    %cst_17 = arith.constant dense<0.000000e+00> : vector<32xf32>
    %12 = vector.multi_reduction <add>, %5, %cst_17 [0] : vector<8x32xf32> to vector<32xf32>
    %13 = vector.shape_cast %12 : vector<32xf32> to vector<1x32xf32>
    %c0_18 = arith.constant 0 : index
    %c0_19 = arith.constant 0 : index
    %14 = vector.load %arg7[%c0_18, %c0_19] : memref<32x32xf32, #tpu.memory_space<vmem>>, vector<32x32xf32>
    %cst_20 = arith.constant dense<0.000000e+00> : vector<1x32xf32>
    %15 = tpu.matmul %13, %14, %cst_20 {dimension_numbers = #tpu.dot_dimension_numbers<[1], [0], [0], [1], [0, 0, 1, 1], [], []>} : vector<1x32xf32>, vector<32x32xf32>, vector<1x32xf32> -> vector<1x32xf32>
    %16 = vector.extract_strided_slice %9 {offsets = [0, 0], sizes = [8, 8], strides = [1, 1]} : vector<8x32xf32> to vector<8x8xf32>
    %17 = vector.extract_strided_slice %11 {offsets = [0, 0], sizes = [8, 8], strides = [1, 1]} : vector<8x32xf32> to vector<8x8xf32>
    %cst_21 = arith.constant dense<0.000000e+00> : vector<8x8xf32>
    %18 = tpu.matmul %16, %17, %cst_21 {dimension_numbers = #tpu.dot_dimension_numbers<[1], [1], [0], [0], [0, 0, 1, 0], [], []>} : vector<8x8xf32>, vector<8x8xf32>, vector<8x8xf32> -> vector<8x8xf32>
    %19 = arith.addf %18, %7 : vector<8x8xf32>
    %cst_22 = arith.constant dense<0xFF800000> : vector<8xf32>
    %20 = vector.multi_reduction <maximumf>, %19, %cst_22 [1] : vector<8x8xf32> to vector<8xf32>
    %cst_23 = arith.constant 0xFF800000 : f32
    %21 = vector.broadcast %cst_23 : f32 to vector<8xf32>
    %22 = arith.maximumf %21, %20 : vector<8xf32>
    %23 = vector.shape_cast %22 : vector<8xf32> to vector<8x1xf32>
    %24 = vector.broadcast %23 : vector<8x1xf32> to vector<8x8xf32>
    %25 = arith.subf %19, %24 : vector<8x8xf32>
    %26 = math.exp %25 : vector<8x8xf32>
    %cst_24 = arith.constant dense<0.000000e+00> : vector<8xf32>
    %27 = vector.multi_reduction <add>, %26, %cst_24 [1] : vector<8x8xf32> to vector<8xf32>
    %28 = vector.shape_cast %27 : vector<8xf32> to vector<8x1xf32>
    %29 = vector.broadcast %28 : vector<8x1xf32> to vector<8x8xf32>
    %30 = arith.divf %26, %29 : vector<8x8xf32>
    %cst_25 = arith.constant dense<0.000000e+00> : vector<8xf32>
    %31 = vector.multi_reduction <add>, %30, %cst_25 [1] : vector<8x8xf32> to vector<8xf32>
    %32 = vector.shape_cast %31 : vector<8xf32> to vector<8x1xf32>
    %33 = vector.extract_strided_slice %15 {offsets = [0, 0], sizes = [1, 8], strides = [1, 1]} : vector<1x32xf32> to vector<1x8xf32>
    %34 = vector.broadcast %32 : vector<8x1xf32> to vector<8x8xf32>
    %35 = vector.broadcast %33 : vector<1x8xf32> to vector<8x8xf32>
    %36 = arith.mulf %34, %35 : vector<8x8xf32>
    %c0_26 = arith.constant 0 : index
    %c0_27 = arith.constant 0 : index
    %37 = vector.load %arg11[%c0_26, %c0_27] : memref<8x32xf32, #tpu.memory_space<vmem>>, vector<8x8xf32>
    tpu.vector_store %arg11[%c0_26, %c0_27], %36 {strides = array<i32>} : memref<8x32xf32, #tpu.memory_space<vmem>>, vector<8x8xf32>,
    %38 = vector.extract_strided_slice %9 {offsets = [0, 8], sizes = [8, 8], strides = [1, 1]} : vector<8x32xf32> to vector<8x8xf32>
    %39 = vector.extract_strided_slice %11 {offsets = [0, 8], sizes = [8, 8], strides = [1, 1]} : vector<8x32xf32> to vector<8x8xf32>
    %cst_28 = arith.constant dense<0.000000e+00> : vector<8x8xf32>
    %40 = tpu.matmul %38, %39, %cst_28 {dimension_numbers = #tpu.dot_dimension_numbers<[1], [1], [0], [0], [0, 0, 1, 0], [], []>} : vector<8x8xf32>, vector<8x8xf32>, vector<8x8xf32> -> vector<8x8xf32>
    %41 = arith.addf %40, %7 : vector<8x8xf32>
    %cst_29 = arith.constant dense<0xFF800000> : vector<8xf32>
    %42 = vector.multi_reduction <maximumf>, %41, %cst_29 [1] : vector<8x8xf32> to vector<8xf32>
    %cst_30 = arith.constant 0xFF800000 : f32
    %43 = vector.broadcast %cst_30 : f32 to vector<8xf32>
    %44 = arith.maximumf %43, %42 : vector<8xf32>
    %45 = vector.shape_cast %44 : vector<8xf32> to vector<8x1xf32>
    %46 = vector.broadcast %45 : vector<8x1xf32> to vector<8x8xf32>
    %47 = arith.subf %41, %46 : vector<8x8xf32>
    %48 = math.exp %47 : vector<8x8xf32>
    %cst_31 = arith.constant dense<0.000000e+00> : vector<8xf32>
    %49 = vector.multi_reduction <add>, %48, %cst_31 [1] : vector<8x8xf32> to vector<8xf32>
    %50 = vector.shape_cast %49 : vector<8xf32> to vector<8x1xf32>
    %51 = vector.broadcast %50 : vector<8x1xf32> to vector<8x8xf32>
    %52 = arith.divf %48, %51 : vector<8x8xf32>
    %cst_32 = arith.constant dense<0.000000e+00> : vector<8xf32>
    %53 = vector.multi_reduction <add>, %52, %cst_32 [1] : vector<8x8xf32> to vector<8xf32>
    %54 = vector.shape_cast %53 : vector<8xf32> to vector<8x1xf32>
    %55 = vector.extract_strided_slice %15 {offsets = [0, 8], sizes = [1, 8], strides = [1, 1]} : vector<1x32xf32> to vector<1x8xf32>
    %56 = vector.broadcast %54 : vector<8x1xf32> to vector<8x8xf32>
    %57 = vector.broadcast %55 : vector<1x8xf32> to vector<8x8xf32>
    %58 = arith.mulf %56, %57 : vector<8x8xf32>
    %c0_33 = arith.constant 0 : index
    %c8 = arith.constant 8 : index
    %59 = vector.load %arg11[%c0_33, %c8] : memref<8x32xf32, #tpu.memory_space<vmem>>, vector<8x8xf32>
    tpu.vector_store %arg11[%c0_33, %c8], %58 {strides = array<i32>} : memref<8x32xf32, #tpu.memory_space<vmem>>, vector<8x8xf32>,
    %60 = vector.extract_strided_slice %9 {offsets = [0, 16], sizes = [8, 8], strides = [1, 1]} : vector<8x32xf32> to vector<8x8xf32>
    %61 = vector.extract_strided_slice %11 {offsets = [0, 16], sizes = [8, 8], strides = [1, 1]} : vector<8x32xf32> to vector<8x8xf32>
    %cst_34 = arith.constant dense<0.000000e+00> : vector<8x8xf32>
    %62 = tpu.matmul %60, %61, %cst_34 {dimension_numbers = #tpu.dot_dimension_numbers<[1], [1], [0], [0], [0, 0, 1, 0], [], []>} : vector<8x8xf32>, vector<8x8xf32>, vector<8x8xf32> -> vector<8x8xf32>
    %63 = arith.addf %62, %7 : vector<8x8xf32>
    %cst_35 = arith.constant dense<0xFF800000> : vector<8xf32>
    %64 = vector.multi_reduction <maximumf>, %63, %cst_35 [1] : vector<8x8xf32> to vector<8xf32>
    %cst_36 = arith.constant 0xFF800000 : f32
    %65 = vector.broadcast %cst_36 : f32 to vector<8xf32>
    %66 = arith.maximumf %65, %64 : vector<8xf32>
    %67 = vector.shape_cast %66 : vector<8xf32> to vector<8x1xf32>
    %68 = vector.broadcast %67 : vector<8x1xf32> to vector<8x8xf32>
    %69 = arith.subf %63, %68 : vector<8x8xf32>
    %70 = math.exp %69 : vector<8x8xf32>
    %cst_37 = arith.constant dense<0.000000e+00> : vector<8xf32>
    %71 = vector.multi_reduction <add>, %70, %cst_37 [1] : vector<8x8xf32> to vector<8xf32>
    %72 = vector.shape_cast %71 : vector<8xf32> to vector<8x1xf32>
    %73 = vector.broadcast %72 : vector<8x1xf32> to vector<8x8xf32>
    %74 = arith.divf %70, %73 : vector<8x8xf32>
    %cst_38 = arith.constant dense<0.000000e+00> : vector<8xf32>
    %75 = vector.multi_reduction <add>, %74, %cst_38 [1] : vector<8x8xf32> to vector<8xf32>
    %76 = vector.shape_cast %75 : vector<8xf32> to vector<8x1xf32>
    %77 = vector.extract_strided_slice %15 {offsets = [0, 16], sizes = [1, 8], strides = [1, 1]} : vector<1x32xf32> to vector<1x8xf32>
    %78 = vector.broadcast %76 : vector<8x1xf32> to vector<8x8xf32>
    %79 = vector.broadcast %77 : vector<1x8xf32> to vector<8x8xf32>
    %80 = arith.mulf %78, %79 : vector<8x8xf32>
    %c0_39 = arith.constant 0 : index
    %c16 = arith.constant 16 : index
    %81 = vector.load %arg11[%c0_39, %c16] : memref<8x32xf32, #tpu.memory_space<vmem>>, vector<8x8xf32>
    tpu.vector_store %arg11[%c0_39, %c16], %80 {strides = array<i32>} : memref<8x32xf32, #tpu.memory_space<vmem>>, vector<8x8xf32>,
    %82 = vector.extract_strided_slice %9 {offsets = [0, 24], sizes = [8, 8], strides = [1, 1]} : vector<8x32xf32> to vector<8x8xf32>
    %83 = vector.extract_strided_slice %11 {offsets = [0, 24], sizes = [8, 8], strides = [1, 1]} : vector<8x32xf32> to vector<8x8xf32>
    %cst_40 = arith.constant dense<0.000000e+00> : vector<8x8xf32>
    %84 = tpu.matmul %82, %83, %cst_40 {dimension_numbers = #tpu.dot_dimension_numbers<[1], [1], [0], [0], [0, 0, 1, 0], [], []>} : vector<8x8xf32>, vector<8x8xf32>, vector<8x8xf32> -> vector<8x8xf32>
    %85 = arith.addf %84, %7 : vector<8x8xf32>
    %cst_41 = arith.constant dense<0xFF800000> : vector<8xf32>
    %86 = vector.multi_reduction <maximumf>, %85, %cst_41 [1] : vector<8x8xf32> to vector<8xf32>
    %cst_42 = arith.constant 0xFF800000 : f32
    %87 = vector.broadcast %cst_42 : f32 to vector<8xf32>
    %88 = arith.maximumf %87, %86 : vector<8xf32>
    %89 = vector.shape_cast %88 : vector<8xf32> to vector<8x1xf32>
    %90 = vector.broadcast %89 : vector<8x1xf32> to vector<8x8xf32>
    %91 = arith.subf %85, %90 : vector<8x8xf32>
    %92 = math.exp %91 : vector<8x8xf32>
    %cst_43 = arith.constant dense<0.000000e+00> : vector<8xf32>
    %93 = vector.multi_reduction <add>, %92, %cst_43 [1] : vector<8x8xf32> to vector<8xf32>
    %94 = vector.shape_cast %93 : vector<8xf32> to vector<8x1xf32>
    %95 = vector.broadcast %94 : vector<8x1xf32> to vector<8x8xf32>
    %96 = arith.divf %92, %95 : vector<8x8xf32>
    %cst_44 = arith.constant dense<0.000000e+00> : vector<8xf32>
    %97 = vector.multi_reduction <add>, %96, %cst_44 [1] : vector<8x8xf32> to vector<8xf32>
    %98 = vector.shape_cast %97 : vector<8xf32> to vector<8x1xf32>
    %99 = vector.extract_strided_slice %15 {offsets = [0, 24], sizes = [1, 8], strides = [1, 1]} : vector<1x32xf32> to vector<1x8xf32>
    %100 = vector.broadcast %98 : vector<8x1xf32> to vector<8x8xf32>
    %101 = vector.broadcast %99 : vector<1x8xf32> to vector<8x8xf32>
    %102 = arith.mulf %100, %101 : vector<8x8xf32>
    %c0_45 = arith.constant 0 : index
    %c24 = arith.constant 24 : index
    %103 = vector.load %arg11[%c0_45, %c24] : memref<8x32xf32, #tpu.memory_space<vmem>>, vector<8x8xf32>
    tpu.vector_store %arg11[%c0_45, %c24], %102 {strides = array<i32>} : memref<8x32xf32, #tpu.memory_space<vmem>>, vector<8x8xf32>,
    %c0_46 = arith.constant 0 : index
    %c0_47 = arith.constant 0 : index
    %104 = vector.load %arg11[%c0_46, %c0_47] : memref<8x32xf32, #tpu.memory_space<vmem>>, vector<8x32xf32>
    %c0_48 = arith.constant 0 : index
    %c0_49 = arith.constant 0 : index
    %105 = vector.load %arg8[%c0_48, %c0_49] : memref<32x32xf32, #tpu.memory_space<vmem>>, vector<32x32xf32>
    %cst_50 = arith.constant dense<0.000000e+00> : vector<8x32xf32>
    %106 = tpu.matmul %104, %105, %cst_50 {dimension_numbers = #tpu.dot_dimension_numbers<[1], [0], [0], [1], [0, 0, 1, 1], [], []>} : vector<8x32xf32>, vector<32x32xf32>, vector<8x32xf32> -> vector<8x32xf32>
    %c0_51 = arith.constant 0 : index
    %c0_52 = arith.constant 0 : index
    %107 = vector.load %arg9[%c0_51, %c0_52] : memref<1x32xf32, #tpu.memory_space<vmem>>, vector<1x32xf32>
    %108 = vector.broadcast %107 : vector<1x32xf32> to vector<8x32xf32>
    %109 = arith.addf %106, %108 : vector<8x32xf32>
    %c0_53 = arith.constant 0 : index
    %c0_54 = arith.constant 0 : index
    %c0_55 = arith.constant 0 : index
    %110 = vector.load %arg10[%c0_53, %c0_54, %c0_55] : memref<1x8x32xf32, #tpu.memory_space<vmem>>, vector<1x8x32xf32>
    %111 = vector.shape_cast %110 : vector<1x8x32xf32> to vector<8x32xf32>
    %112 = vector.shape_cast %109 : vector<8x32xf32> to vector<1x8x32xf32>
    tpu.vector_store %arg10[%c0_53, %c0_54, %c0_55], %112 {strides = array<i32>} : memref<1x8x32xf32, #tpu.memory_space<vmem>>, vector<1x8x32xf32>,
    return
  }
  func.func @transform_0(%arg0: i32) -> (i32, i32, i32) {
    %c0_i32 = arith.constant 0 : i32
    %c0_i32_0 = arith.constant 0 : i32
    %c0_i32_1 = arith.constant 0 : i32
    return %arg0, %c0_i32, %c0_i32_0 : i32, i32, i32
  }
  func.func @transform_1(%arg0: i32) -> (i32, i32, i32) {
    %c0_i32 = arith.constant 0 : i32
    %c0_i32_0 = arith.constant 0 : i32
    %c0_i32_1 = arith.constant 0 : i32
    return %arg0, %c0_i32, %c0_i32_0 : i32, i32, i32
  }
  func.func @transform_2(%arg0: i32) -> (i32, i32, i32) {
    %c0_i32 = arith.constant 0 : i32
    %c0_i32_0 = arith.constant 0 : i32
    %c0_i32_1 = arith.constant 0 : i32
    return %arg0, %c0_i32, %c0_i32_0 : i32, i32, i32
  }
  func.func @transform_3(%arg0: i32) -> (i32, i32, i32, i32) {
    %c0_i32 = arith.constant 0 : i32
    %c0_i32_0 = arith.constant 0 : i32
    %c0_i32_1 = arith.constant 0 : i32
    %c0_i32_2 = arith.constant 0 : i32
    return %arg0, %c0_i32, %c0_i32_0, %c0_i32_1 : i32, i32, i32, i32
  }
  func.func @transform_4(%arg0: i32) -> (i32, i32) {
    %c0_i32 = arith.constant 0 : i32
    %c0_i32_0 = arith.constant 0 : i32
    %c0_i32_1 = arith.constant 0 : i32
    return %c0_i32, %c0_i32_0 : i32, i32
  }
  func.func @transform_5(%arg0: i32) -> (i32, i32) {
    %c0_i32 = arith.constant 0 : i32
    %c0_i32_0 = arith.constant 0 : i32
    %c0_i32_1 = arith.constant 0 : i32
    return %c0_i32, %c0_i32_0 : i32, i32
  }
  func.func @transform_6(%arg0: i32) -> (i32, i32) {
    %c0_i32 = arith.constant 0 : i32
    %c0_i32_0 = arith.constant 0 : i32
    %c0_i32_1 = arith.constant 0 : i32
    return %c0_i32, %c0_i32_0 : i32, i32
  }
  func.func @transform_7(%arg0: i32) -> (i32, i32) {
    %c0_i32 = arith.constant 0 : i32
    %c0_i32_0 = arith.constant 0 : i32
    %c0_i32_1 = arith.constant 0 : i32
    return %c0_i32, %c0_i32_0 : i32, i32
  }
  func.func @transform_8(%arg0: i32) -> (i32, i32) {
    %c0_i32 = arith.constant 0 : i32
    %c0_i32_0 = arith.constant 0 : i32
    %c0_i32_1 = arith.constant 0 : i32
    return %c0_i32, %c0_i32_0 : i32, i32
  }
  func.func @transform_9(%arg0: i32) -> (i32, i32, i32) {
    %c0_i32 = arith.constant 0 : i32
    %c0_i32_0 = arith.constant 0 : i32
    %c0_i32_1 = arith.constant 0 : i32
    return %arg0, %c0_i32, %c0_i32_0 : i32, i32, i32
  }
}

</mosaic_0001>

<llo_original>
// kernel: tpu_custom_call.1
$region0: #{tpu_custom_call.1}
  #allocation0 [shape = 'u32[]', space=smem, size = 0x4, offset = 0x4, fixed_abs, tag = 'smem constant byte address 0x4 - core index']
  #allocation1 [shape = 'u32[72,128]{1,0:T(1,128)}', space=vmem, size = 0x9000, scoped, tag = 'internal scratch']
  #allocation2 [shape = 'f32[8,32]{1,0:T(8,128)}', space=vmem, size = 0x1000, scoped, tag = 'scratch operand']
  %s0 = inlined_call_operand.hbm [shape: f32[2,8,32], index: 0, kind: input, shape index: {}]
  %s1 = inlined_call_operand.hbm [shape: f32[2,8,32], index: 1, kind: input, shape index: {}]
  %s2 = inlined_call_operand.hbm [shape: f32[2,8,32], index: 2, kind: input, shape index: {}]
  %s3 = inlined_call_operand.hbm [shape: f32[2,1,8,8], index: 3, kind: input, shape index: {}]
  %s4 = inlined_call_operand.hbm [shape: f32[32,32], index: 4, kind: input, shape index: {}]
  %s5 = inlined_call_operand.hbm [shape: f32[32,32], index: 5, kind: input, shape index: {}]
  %s6 = inlined_call_operand.hbm [shape: f32[32,32], index: 6, kind: input, shape index: {}]
  %s7 = inlined_call_operand.hbm [shape: f32[32,32], index: 7, kind: input, shape index: {}]
  %s8 = inlined_call_operand.vmem [shape: f32[1,32], index: 8, kind: input, shape index: {}]
  %s9 = inlined_call_operand.hbm [shape: f32[2,8,32], index: 9, kind: output, shape index: {}]
  %s10 = sld [smem:[#allocation0]]
  $region101: #{tpu_custom_call.1} parent=0
    _
  %s12 = ssub.s32 1, %s10
  %s13 = scalar_select 0, %s12, %s10
  $region1: #{tpu_custom_call.1} parent=0
    #allocation3 [shape = 'u8[8192]{0}', space=vmem, size = 0x2000, scoped, tag = 'input window, operand 0']
    #allocation4 [shape = 's32[2]{0}', space=sflag, size = 0x8, scoped, tag = 'scoped memory for tpu_custom_call.1']
    #allocation5 [shape = 's32[2]{0}', space=sflag, size = 0x8, scoped, tag = 'scoped memory for tpu_custom_call.1']
    #allocation6 [shape = 'u8[8192]{0}', space=vmem, size = 0x2000, scoped, tag = 'input window, operand 1']
    #allocation7 [shape = 's32[2]{0}', space=sflag, size = 0x8, scoped, tag = 'scoped memory for tpu_custom_call.1']
    #allocation8 [shape = 'u8[8192]{0}', space=vmem, size = 0x2000, scoped, tag = 'input window, operand 2']
    #allocation9 [shape = 'u8[8192]{0}', space=vmem, size = 0x2000, scoped, tag = 'input window, operand 3']
    #allocation10 [shape = 's32[2]{0}', space=sflag, size = 0x8, scoped, tag = 'scoped memory for tpu_custom_call.1']
    #allocation11 [shape = 'u8[16384]{0}', space=vmem, size = 0x4000, scoped, tag = 'input window, operand 4, single buffered']
    #allocation12 [shape = 'u8[16384]{0}', space=vmem, size = 0x4000, scoped, tag = 'input window, operand 5, single buffered']
    #allocation13 [shape = 's32[1]{0}', space=sflag, size = 0x4, scoped, tag = 'scoped memory for tpu_custom_call.1']
    #allocation14 [shape = 'u8[16384]{0}', space=vmem, size = 0x4000, scoped, tag = 'input window, operand 6, single buffered']
    #allocation15 [shape = 'u8[16384]{0}', space=vmem, size = 0x4000, scoped, tag = 'input window, operand 7, single buffered']
    #allocation16 [shape = 's32[1]{0}', space=sflag, size = 0x4, scoped, tag = 'scoped memory for tpu_custom_call.1']
    #allocation17 [shape = 'u8[8192]{0}', space=vmem, size = 0x2000, scoped, tag = 'output window, operand 0']
    %14 = vsyncpa [#allocation4], 0
    %s15 = scalar_lea.sflag [#allocation4], 1
    %16 = vsyncpa %s15, 0
    %17 = vsyncpa [#allocation7], 0
    %s18 = scalar_lea.sflag [#allocation7], 1
    %19 = vsyncpa %s18, 0
    %20 = vsyncpa [#allocation10], 0
    %s21 = scalar_lea.sflag [#allocation10], 1
    %22 = vsyncpa %s21, 0
    %23 = vsyncpa [#allocation13], 0
    %24 = vsyncpa [#allocation16], 0
    %25 = vsyncpa [#allocation5], 0
    %s26 = scalar_lea.sflag [#allocation5], 1
    %27 = vsyncpa %s26, 0
    loop: start=0, step=1, limit=4
    $region2: #{tpu_custom_call.1} parent=1 // loop_pre_header
      _
    $region3: #{tpu_custom_call.1} parent=1 // loop_header
      %s29 = sphi 0, %s33
      %p30 = scmp.ge.s32.totalorder %s29, 4
      %s39 = sphi 0, %s41
      %s42 = sphi 0, %s39
      %s43 = sphi 0, %s42
      %s59 = sphi 0, %s43
      %s65 = sphi 0, %s67
      %s68 = sphi 0, %s65
      %s69 = sphi 0, %s68
      %s85 = sphi 0, %s69
      %s91 = sphi 0, %s93
      %s94 = sphi 0, %s91
      %s95 = sphi 0, %s94
      %s111 = sphi 0, %s95
      %s117 = sphi 0, %s119
      %s120 = sphi 0, %s117
      %s121 = sphi 0, %s120
      %s137 = sphi 0, %s121
      %s141 = sphi 0, %s141
      %s143 = sphi 0, %s141
      %s144 = sphi 0, %s143
      %s158 = sphi 0, %s144
      %s162 = sphi 0, %s162
      %s164 = sphi 0, %s162
      %s165 = sphi 0, %s164
      %s179 = sphi 0, %s165
      %s183 = sphi 0, %s183
      %s185 = sphi 0, %s183
      %s186 = sphi 0, %s185
      %s200 = sphi 0, %s186
      %s204 = sphi 0, %s204
      %s206 = sphi 0, %s204
      %s207 = sphi 0, %s206
      %s221 = sphi 0, %s207
      %s225 = sphi 0, %s225
      %s227 = sphi 0, %s225
      %s228 = sphi 0, %s227
      %s242 = sphi 0, %s228
      %s248 = sphi 0, %s250
      %s251 = sphi 0, %s248
      %s252 = sphi 0, %s251
      %s268 = sphi 0, %s252
    $region4: #{tpu_custom_call.1} parent=1 // loop_header_branch
      %32 = sbr.rel (%p30) target = $region8
    $region5: #{tpu_custom_call.1} parent=1 // loop_body
      %s34 = ssub.s32 %s29, 1
      %s35 = ssub.s32 %s29, 2
      %s36 = sadd.s32 %s29, 1
      %s37 = ssub.s32 %s29, %s36
      %p38 = scmp.eq.s32.totalorder %s37, 0
      %s40 = sadd.s32 %s39, 1
      %s41 = scalar_select %p38, %s39, %s40
      %p44 = pneg %p38
      %p45 = scmp.eq.s32.totalorder %s29, 1
      %p46 = por %p44, %p45
      %p47 = scmp.ne.s32.totalorder %s39, %s42
      %p48 = scmp.eq.s32.totalorder %s29, 0
      %p49 = por %p47, %p48
      %p50 = scmp.ne.s32.totalorder %s39, %s42
      %p51 = scmp.eq.s32.totalorder %s34, 1
      %p52 = por %p50, %p51
      %p53 = scmp.ne.s32.totalorder %s42, %s43
      %p54 = scmp.eq.s32.totalorder %s34, 0
      %p55 = por %p53, %p54
      %p56 = scmp.ne.s32.totalorder %s42, %s43
      %p57 = scmp.eq.s32.totalorder %s35, 1
      %p58 = por %p56, %p57
      %p60 = scmp.ne.s32.totalorder %s43, %s59
      %p61 = scmp.eq.s32.totalorder %s35, 0
      %p62 = por %p60, %p61
      %s63 = ssub.s32 %s29, %s36
      %p64 = scmp.eq.s32.totalorder %s63, 0
      %s66 = sadd.s32 %s65, 1
      %s67 = scalar_select %p64, %s65, %s66
      %p70 = pneg %p64
      %p71 = scmp.eq.s32.totalorder %s29, 1
      %p72 = por %p70, %p71
      %p73 = scmp.ne.s32.totalorder %s65, %s68
      %p74 = scmp.eq.s32.totalorder %s29, 0
      %p75 = por %p73, %p74
      %p76 = scmp.ne.s32.totalorder %s65, %s68
      %p77 = scmp.eq.s32.totalorder %s34, 1
      %p78 = por %p76, %p77
      %p79 = scmp.ne.s32.totalorder %s68, %s69
      %p80 = scmp.eq.s32.totalorder %s34, 0
      %p81 = por %p79, %p80
      %p82 = scmp.ne.s32.totalorder %s68, %s69
      %p83 = scmp.eq.s32.totalorder %s35, 1
      %p84 = por %p82, %p83
      %p86 = scmp.ne.s32.totalorder %s69, %s85
      %p87 = scmp.eq.s32.totalorder %s35, 0
      %p88 = por %p86, %p87
      %s89 = ssub.s32 %s29, %s36
      %p90 = scmp.eq.s32.totalorder %s89, 0
      %s92 = sadd.s32 %s91, 1
      %s93 = scalar_select %p90, %s91, %s92
      %p96 = pneg %p90
      %p97 = scmp.eq.s32.totalorder %s29, 1
      %p98 = por %p96, %p97
      %p99 = scmp.ne.s32.totalorder %s91, %s94
      %p100 = scmp.eq.s32.totalorder %s29, 0
      %p101 = por %p99, %p100
      %p102 = scmp.ne.s32.totalorder %s91, %s94
      %p103 = scmp.eq.s32.totalorder %s34, 1
      %p104 = por %p102, %p103
      %p105 = scmp.ne.s32.totalorder %s94, %s95
      %p106 = scmp.eq.s32.totalorder %s34, 0
      %p107 = por %p105, %p106
      %p108 = scmp.ne.s32.totalorder %s94, %s95
      %p109 = scmp.eq.s32.totalorder %s35, 1
      %p110 = por %p108, %p109
      %p112 = scmp.ne.s32.totalorder %s95, %s111
      %p113 = scmp.eq.s32.totalorder %s35, 0
      %p114 = por %p112, %p113
      %s115 = ssub.s32 %s29, %s36
      %p116 = scmp.eq.s32.totalorder %s115, 0
      %s118 = sadd.s32 %s117, 1
      %s119 = scalar_select %p116, %s117, %s118
      %p122 = pneg %p116
      %p123 = scmp.eq.s32.totalorder %s29, 1
      %p124 = por %p122, %p123
      %p125 = scmp.ne.s32.totalorder %s117, %s120
      %p126 = scmp.eq.s32.totalorder %s29, 0
      %p127 = por %p125, %p126
      %p128 = scmp.ne.s32.totalorder %s117, %s120
      %p129 = scmp.eq.s32.totalorder %s34, 1
      %p130 = por %p128, %p129
      %p131 = scmp.ne.s32.totalorder %s120, %s121
      %p132 = scmp.eq.s32.totalorder %s34, 0
      %p133 = por %p131, %p132
      %p134 = scmp.ne.s32.totalorder %s120, %s121
      %p135 = scmp.eq.s32.totalorder %s35, 1
      %p136 = por %p134, %p135
      %p138 = scmp.ne.s32.totalorder %s121, %s137
      %p139 = scmp.eq.s32.totalorder %s35, 0
      %p140 = por %p138, %p139
      %s142 = sadd.s32 %s141, 1
      %p145 = scmp.eq.s32.totalorder %s29, 1
      %p146 = scmp.ne.s32.totalorder %s141, %s143
      %p147 = scmp.eq.s32.totalorder %s29, 0
      %p148 = por %p146, %p147
      %p149 = scmp.ne.s32.totalorder %s141, %s143
      %p150 = scmp.eq.s32.totalorder %s34, 1
      %p151 = por %p149, %p150
      %p152 = scmp.ne.s32.totalorder %s143, %s144
      %p153 = scmp.eq.s32.totalorder %s34, 0
      %p154 = por %p152, %p153
      %p155 = scmp.ne.s32.totalorder %s143, %s144
      %p156 = scmp.eq.s32.totalorder %s35, 1
      %p157 = por %p155, %p156
      %p159 = scmp.ne.s32.totalorder %s144, %s158
      %p160 = scmp.eq.s32.totalorder %s35, 0
      %p161 = por %p159, %p160
      %s163 = sadd.s32 %s162, 1
      %p166 = scmp.eq.s32.totalorder %s29, 1
      %p167 = scmp.ne.s32.totalorder %s162, %s164
      %p168 = scmp.eq.s32.totalorder %s29, 0
      %p169 = por %p167, %p168
      %p170 = scmp.ne.s32.totalorder %s162, %s164
      %p171 = scmp.eq.s32.totalorder %s34, 1
      %p172 = por %p170, %p171
      %p173 = scmp.ne.s32.totalorder %s164, %s165
      %p174 = scmp.eq.s32.totalorder %s34, 0
      %p175 = por %p173, %p174
      %p176 = scmp.ne.s32.totalorder %s164, %s165
      %p177 = scmp.eq.s32.totalorder %s35, 1
      %p178 = por %p176, %p177
      %p180 = scmp.ne.s32.totalorder %s165, %s179
      %p181 = scmp.eq.s32.totalorder %s35, 0
      %p182 = por %p180, %p181
      %s184 = sadd.s32 %s183, 1
      %p187 = scmp.eq.s32.totalorder %s29, 1
      %p188 = scmp.ne.s32.totalorder %s183, %s185
      %p189 = scmp.eq.s32.totalorder %s29, 0
      %p190 = por %p188, %p189
      %p191 = scmp.ne.s32.totalorder %s183, %s185
      %p192 = scmp.eq.s32.totalorder %s34, 1
      %p193 = por %p191, %p192
      %p194 = scmp.ne.s32.totalorder %s185, %s186
      %p195 = scmp.eq.s32.totalorder %s34, 0
      %p196 = por %p194, %p195
      %p197 = scmp.ne.s32.totalorder %s185, %s186
      %p198 = scmp.eq.s32.totalorder %s35, 1
      %p199 = por %p197, %p198
      %p201 = scmp.ne.s32.totalorder %s186, %s200
      %p202 = scmp.eq.s32.totalorder %s35, 0
      %p203 = por %p201, %p202
      %s205 = sadd.s32 %s204, 1
      %p208 = scmp.eq.s32.totalorder %s29, 1
      %p209 = scmp.ne.s32.totalorder %s204, %s206
      %p210 = scmp.eq.s32.totalorder %s29, 0
      %p211 = por %p209, %p210
      %p212 = scmp.ne.s32.totalorder %s204, %s206
      %p213 = scmp.eq.s32.totalorder %s34, 1
      %p214 = por %p212, %p213
      %p215 = scmp.ne.s32.totalorder %s206, %s207
      %p216 = scmp.eq.s32.totalorder %s34, 0
      %p217 = por %p215, %p216
      %p218 = scmp.ne.s32.totalorder %s206, %s207
      %p219 = scmp.eq.s32.totalorder %s35, 1
      %p220 = por %p218, %p219
      %p222 = scmp.ne.s32.totalorder %s207, %s221
      %p223 = scmp.eq.s32.totalorder %s35, 0
      %p224 = por %p222, %p223
      %s226 = sadd.s32 %s225, 1
      %p229 = scmp.eq.s32.totalorder %s29, 1
      %p230 = scmp.ne.s32.totalorder %s225, %s227
      %p231 = scmp.eq.s32.totalorder %s29, 0
      %p232 = por %p230, %p231
      %p233 = scmp.ne.s32.totalorder %s225, %s227
      %p234 = scmp.eq.s32.totalorder %s34, 1
      %p235 = por %p233, %p234
      %p236 = scmp.ne.s32.totalorder %s227, %s228
      %p237 = scmp.eq.s32.totalorder %s34, 0
      %p238 = por %p236, %p237
      %p239 = scmp.ne.s32.totalorder %s227, %s228
      %p240 = scmp.eq.s32.totalorder %s35, 1
      %p241 = por %p239, %p240
      %p243 = scmp.ne.s32.totalorder %s228, %s242
      %p244 = scmp.eq.s32.totalorder %s35, 0
      %p245 = por %p243, %p244
      %s246 = ssub.s32 %s29, %s36
      %p247 = scmp.eq.s32.totalorder %s246, 0
      %s249 = sadd.s32 %s248, 1
      %s250 = scalar_select %p247, %s248, %s249
      %p253 = pneg %p247
      %p254 = scmp.eq.s32.totalorder %s29, 1
      %p255 = por %p253, %p254
      %p256 = scmp.ne.s32.totalorder %s248, %s251
      %p257 = scmp.eq.s32.totalorder %s29, 0
      %p258 = por %p256, %p257
      %p259 = scmp.ne.s32.totalorder %s248, %s251
      %p260 = scmp.eq.s32.totalorder %s34, 1
      %p261 = por %p259, %p260
      %p262 = scmp.ne.s32.totalorder %s251, %s252
      %p263 = scmp.eq.s32.totalorder %s34, 0
      %p264 = por %p262, %p263
      %p265 = scmp.ne.s32.totalorder %s251, %s252
      %p266 = scmp.eq.s32.totalorder %s35, 1
      %p267 = por %p265, %p266
      %p269 = scmp.ne.s32.totalorder %s252, %s268
      %p270 = scmp.eq.s32.totalorder %s35, 0
      %p271 = por %p269, %p270
      %p272 = scmp.le.s32.totalorder 1, %s29
      %p273 = scmp.lt.s32.totalorder %s29, 3
      %p274 = pnand %p272, %p273
      %p275 = pneg %p274
      // Predicated region
      $region9: #{tpu_custom_call.1} parent=5 // pred_check
        _
      $region10: #{tpu_custom_call.1} parent=5 // pred_check_branch
        %277 = sbr.rel (%p274) target = $region12
      $region11: #{tpu_custom_call.1} parent=5 // pred_region
        %s278 = ssub.s32 %s29, 1
        // Predicated region
        $region13: #{tpu_custom_call.1} parent=11 // pred_check
          %p279 = pneg %p154
        $region14: #{tpu_custom_call.1} parent=11 // pred_check_branch
          %281 = sbr.rel (%p279) target = $region16
        $region15: #{tpu_custom_call.1} parent=11 // pred_region
          %283 = vsyncadd [#allocation10], 0
          %s284 = sshll.u32 %s4, 4
          %s285 = int_to_ptr.hbm [resolvable:$true] %s284
          %s286 = sshll.u32 [#allocation11], 4
          %s287 = int_to_ptr.vmem [resolvable:$true] %s286
          %292 = dma.hbm_to_vmem [thread:$0]  %s285, 512, %s287, [#allocation10], 128, 128, 8
        $region16: #{tpu_custom_call.1} parent=11 // pred_fallthru
          _
        // Predicated region
        $region17: #{tpu_custom_call.1} parent=11 // pred_check
          %p293 = pneg %p175
        $region18: #{tpu_custom_call.1} parent=11 // pred_check_branch
          %295 = sbr.rel (%p293) target = $region20
        $region19: #{tpu_custom_call.1} parent=11 // pred_region
          %297 = vsyncadd [#allocation13], 0
          %s298 = sshll.u32 %s5, 4
          %s299 = int_to_ptr.hbm [resolvable:$true] %s298
          %s300 = sshll.u32 [#allocation12], 4
          %s301 = int_to_ptr.vmem [resolvable:$true] %s300
          %306 = dma.hbm_to_vmem [thread:$0]  %s299, 512, %s301, [#allocation13], 128, 128, 8
        $region20: #{tpu_custom_call.1} parent=11 // pred_fallthru
          _
        // Predicated region
        $region21: #{tpu_custom_call.1} parent=11 // pred_check
          %p307 = pneg %p196
        $region22: #{tpu_custom_call.1} parent=11 // pred_check_branch
          %309 = sbr.rel (%p307) target = $region24
        $region23: #{tpu_custom_call.1} parent=11 // pred_region
          %311 = vsyncadd [#allocation13], 0
          %s312 = sshll.u32 %s6, 4
          %s313 = int_to_ptr.hbm [resolvable:$true] %s312
          %s314 = sshll.u32 [#allocation14], 4
          %s315 = int_to_ptr.vmem [resolvable:$true] %s314
          %320 = dma.hbm_to_vmem [thread:$0]  %s313, 512, %s315, [#allocation13], 128, 128, 8
        $region24: #{tpu_custom_call.1} parent=11 // pred_fallthru
          _
        // Predicated region
        $region25: #{tpu_custom_call.1} parent=11 // pred_check
          %p321 = pneg %p217
        $region26: #{tpu_custom_call.1} parent=11 // pred_check_branch
          %323 = sbr.rel (%p321) target = $region28
        $region27: #{tpu_custom_call.1} parent=11 // pred_region
          %325 = vsyncadd [#allocation16], 0
          %s326 = sshll.u32 %s7, 4
          %s327 = int_to_ptr.hbm [resolvable:$true] %s326
          %s328 = sshll.u32 [#allocation15], 4
          %s329 = int_to_ptr.vmem [resolvable:$true] %s328
          %334 = dma.hbm_to_vmem [thread:$0]  %s327, 512, %s329, [#allocation16], 128, 128, 8
        $region28: #{tpu_custom_call.1} parent=11 // pred_fallthru
          _
        // Predicated region
        $region29: #{tpu_custom_call.1} parent=11 // pred_check
          %p335 = pneg %p238
        $region30: #{tpu_custom_call.1} parent=11 // pred_check_branch
          %337 = sbr.rel (%p335) target = $region32
        $region31: #{tpu_custom_call.1} parent=11 // pred_region
          _
        $region32: #{tpu_custom_call.1} parent=11 // pred_fallthru
          _
      $region12: #{tpu_custom_call.1} parent=5 // pred_fallthru
        _
      %p338 = scmp.lt.s32.totalorder %s29, 2
      // Predicated region
      $region33: #{tpu_custom_call.1} parent=5 // pred_check
        %p339 = pneg %p338
      $region34: #{tpu_custom_call.1} parent=5 // pred_check_branch
        %341 = sbr.rel (%p339) target = $region36
      $region35: #{tpu_custom_call.1} parent=5 // pred_region
        // Predicated region
        $region37: #{tpu_custom_call.1} parent=35 // pred_check
          %p342 = pneg %p49
        $region38: #{tpu_custom_call.1} parent=35 // pred_check_branch
          %344 = sbr.rel (%p342) target = $region40
        $region39: #{tpu_custom_call.1} parent=35 // pred_region
          %s345 = sand.u32 %s39, 1
          %s346 = scalar_lea.sflag [#allocation4], %s345
          %s347 = sand.u32 %s39, 1
          %s348 = smul.addr %s347, 8
          %s349 = scalar_lea.vmem [#allocation3], %s348
          %351 = vsyncadd %s346, 0
          %s352 = smul.addr %s29, 8
          %s353 = scalar_lea.hbm %s0, %s352
          %s355 = sshll.u32 %s353, 4
          %s356 = int_to_ptr.hbm [resolvable:$true] %s355
          %s357 = sshll.u32 %s349, 4
          %s358 = int_to_ptr.vmem [resolvable:$true] %s357
          %360 = dma.hbm_to_vmem [thread:$0]  %s356, 128, %s358, %s346
        $region40: #{tpu_custom_call.1} parent=35 // pred_fallthru
          _
        // Predicated region
        $region41: #{tpu_custom_call.1} parent=35 // pred_check
          %p361 = pneg %p75
        $region42: #{tpu_custom_call.1} parent=35 // pred_check_branch
          %363 = sbr.rel (%p361) target = $region44
        $region43: #{tpu_custom_call.1} parent=35 // pred_region
          %s364 = sand.u32 %s29, 1
          %s365 = scalar_lea.sflag [#allocation7], %s364
          %s366 = sand.u32 %s65, 1
          %s367 = smul.addr %s366, 8
          %s368 = scalar_lea.vmem [#allocation6], %s367
          %370 = vsyncadd %s365, 0
          %s371 = smul.addr %s29, 8
          %s372 = scalar_lea.hbm %s1, %s371
          %s374 = sshll.u32 %s372, 4
          %s375 = int_to_ptr.hbm [resolvable:$true] %s374
          %s376 = sshll.u32 %s368, 4
          %s377 = int_to_ptr.vmem [resolvable:$true] %s376
          %379 = dma.hbm_to_vmem [thread:$0]  %s375, 128, %s377, %s365
        $region44: #{tpu_custom_call.1} parent=35 // pred_fallthru
          _
        // Predicated region
        $region45: #{tpu_custom_call.1} parent=35 // pred_check
          %p380 = pneg %p101
        $region46: #{tpu_custom_call.1} parent=35 // pred_check_branch
          %382 = sbr.rel (%p380) target = $region48
        $region47: #{tpu_custom_call.1} parent=35 // pred_region
          %s383 = sand.u32 %s29, 1
          %s384 = scalar_lea.sflag [#allocation7], %s383
          %s385 = sand.u32 %s91, 1
          %s386 = smul.addr %s385, 8
          %s387 = scalar_lea.vmem [#allocation8], %s386
          %389 = vsyncadd %s384, 0
          %s390 = smul.addr %s29, 8
          %s391 = scalar_lea.hbm %s2, %s390
          %s393 = sshll.u32 %s391, 4
          %s394 = int_to_ptr.hbm [resolvable:$true] %s393
          %s395 = sshll.u32 %s387, 4
          %s396 = int_to_ptr.vmem [resolvable:$true] %s395
          %398 = dma.hbm_to_vmem [thread:$0]  %s394, 128, %s396, %s384
        $region48: #{tpu_custom_call.1} parent=35 // pred_fallthru
          _
        // Predicated region
        $region49: #{tpu_custom_call.1} parent=35 // pred_check
          %p399 = pneg %p127
        $region50: #{tpu_custom_call.1} parent=35 // pred_check_branch
          %401 = sbr.rel (%p399) target = $region52
        $region51: #{tpu_custom_call.1} parent=35 // pred_region
          %s402 = sand.u32 %s29, 1
          %s403 = scalar_lea.sflag [#allocation10], %s402
          %s404 = sand.u32 %s117, 1
          %s405 = smul.addr %s404, 8
          %s406 = scalar_lea.vmem [#allocation9], %s405
          %408 = vsyncadd %s403, 0
          %s409 = smul.addr %s29, 8
          %s410 = scalar_lea.hbm %s3, %s409
          %s412 = sshll.u32 %s410, 4
          %s413 = int_to_ptr.hbm [resolvable:$true] %s412
          %s414 = sshll.u32 %s406, 4
          %s415 = int_to_ptr.vmem [resolvable:$true] %s414
          %417 = dma.hbm_to_vmem [thread:$0]  %s413, 128, %s415, %s403
        $region52: #{tpu_custom_call.1} parent=35 // pred_fallthru
          _
      $region36: #{tpu_custom_call.1} parent=5 // pred_fallthru
        _
      %p418 = scmp.le.s32.totalorder 1, %s29
      %p419 = scmp.lt.s32.totalorder %s29, 3
      %p420 = pnand %p418, %p419
      %p421 = pneg %p420
      // Predicated region
      $region53: #{tpu_custom_call.1} parent=5 // pred_check
        _
      $region54: #{tpu_custom_call.1} parent=5 // pred_check_branch
        %423 = sbr.rel (%p420) target = $region56
      $region55: #{tpu_custom_call.1} parent=5 // pred_region
        %s424 = ssub.s32 %s29, 1
        %s425 = sand.u32 %s42, 1
        %s426 = scalar_lea.sflag [#allocation4], %s425
        %s427 = sand.u32 %s42, 1
        %s428 = smul.addr %s427, 8
        %s429 = scalar_lea.vmem [#allocation3], %s428
        // Predicated region
        $region57: #{tpu_custom_call.1} parent=55 // pred_check
          %p430 = pneg %p55
        $region58: #{tpu_custom_call.1} parent=55 // pred_check_branch
          %432 = sbr.rel (%p430) target = $region60
        $region59: #{tpu_custom_call.1} parent=55 // pred_region
          %434 = dma.done %s426, 128
        $region60: #{tpu_custom_call.1} parent=55 // pred_fallthru
          _
        %s435 = sand.u32 %s34, 1
        %s436 = scalar_lea.sflag [#allocation7], %s435
        %s437 = sand.u32 %s68, 1
        %s438 = smul.addr %s437, 8
        %s439 = scalar_lea.vmem [#allocation6], %s438
        // Predicated region
        $region61: #{tpu_custom_call.1} parent=55 // pred_check
          %p440 = pneg %p81
        $region62: #{tpu_custom_call.1} parent=55 // pred_check_branch
          %442 = sbr.rel (%p440) target = $region64
        $region63: #{tpu_custom_call.1} parent=55 // pred_region
          %444 = dma.done %s436, 128
        $region64: #{tpu_custom_call.1} parent=55 // pred_fallthru
          _
        %s445 = sand.u32 %s34, 1
        %s446 = scalar_lea.sflag [#allocation7], %s445
        %s447 = sand.u32 %s94, 1
        %s448 = smul.addr %s447, 8
        %s449 = scalar_lea.vmem [#allocation8], %s448
        // Predicated region
        $region65: #{tpu_custom_call.1} parent=55 // pred_check
          %p450 = pneg %p107
        $region66: #{tpu_custom_call.1} parent=55 // pred_check_branch
          %452 = sbr.rel (%p450) target = $region68
        $region67: #{tpu_custom_call.1} parent=55 // pred_region
          %454 = dma.done %s446, 128
        $region68: #{tpu_custom_call.1} parent=55 // pred_fallthru
          _
        %s455 = sand.u32 %s34, 1
        %s456 = scalar_lea.sflag [#allocation10], %s455
        %s457 = sand.u32 %s120, 1
        %s458 = smul.addr %s457, 8
        %s459 = scalar_lea.vmem [#allocation9], %s458
        // Predicated region
        $region69: #{tpu_custom_call.1} parent=55 // pred_check
          %p460 = pneg %p133
        $region70: #{tpu_custom_call.1} parent=55 // pred_check_branch
          %462 = sbr.rel (%p460) target = $region72
        $region71: #{tpu_custom_call.1} parent=55 // pred_region
          %464 = dma.done %s456, 128
        $region72: #{tpu_custom_call.1} parent=55 // pred_fallthru
          _
        // Predicated region
        $region73: #{tpu_custom_call.1} parent=55 // pred_check
          %p465 = pneg %p154
        $region74: #{tpu_custom_call.1} parent=55 // pred_check_branch
          %467 = sbr.rel (%p465) target = $region76
        $region75: #{tpu_custom_call.1} parent=55 // pred_region
          %469 = dma.done [#allocation10], 512
        $region76: #{tpu_custom_call.1} parent=55 // pred_fallthru
          _
        // Predicated region
        $region77: #{tpu_custom_call.1} parent=55 // pred_check
          %p470 = pneg %p175
        $region78: #{tpu_custom_call.1} parent=55 // pred_check_branch
          %472 = sbr.rel (%p470) target = $region80
        $region79: #{tpu_custom_call.1} parent=55 // pred_region
          %474 = dma.done [#allocation13], 512
        $region80: #{tpu_custom_call.1} parent=55 // pred_fallthru
          _
        // Predicated region
        $region81: #{tpu_custom_call.1} parent=55 // pred_check
          %p475 = pneg %p196
        $region82: #{tpu_custom_call.1} parent=55 // pred_check_branch
          %477 = sbr.rel (%p475) target = $region84
        $region83: #{tpu_custom_call.1} parent=55 // pred_region
          %479 = dma.done [#allocation13], 512
        $region84: #{tpu_custom_call.1} parent=55 // pred_fallthru
          _
        // Predicated region
        $region85: #{tpu_custom_call.1} parent=55 // pred_check
          %p480 = pneg %p217
        $region86: #{tpu_custom_call.1} parent=55 // pred_check_branch
          %482 = sbr.rel (%p480) target = $region88
        $region87: #{tpu_custom_call.1} parent=55 // pred_region
          %484 = dma.done [#allocation16], 512
        $region88: #{tpu_custom_call.1} parent=55 // pred_fallthru
          _
        %s485 = sand.u32 %s42, 1
        %s486 = scalar_lea.sflag [#allocation4], %s485
        %s487 = sand.u32 %s42, 1
        %s488 = smul.addr %s487, 8
        %s489 = scalar_lea.vmem [#allocation3], %s488
        %p490 = pneg %p55
        %p491 = pneg %p52
        %s492 = sand.u32 %s34, 1
        %s493 = scalar_lea.sflag [#allocation7], %s492
        %s494 = sand.u32 %s68, 1
        %s495 = smul.addr %s494, 8
        %s496 = scalar_lea.vmem [#allocation6], %s495
        %p497 = pneg %p81
        %p498 = pneg %p78
        %s499 = sand.u32 %s34, 1
        %s500 = scalar_lea.sflag [#allocation7], %s499
        %s501 = sand.u32 %s94, 1
        %s502 = smul.addr %s501, 8
        %s503 = scalar_lea.vmem [#allocation8], %s502
        %p504 = pneg %p107
        %p505 = pneg %p104
        %s506 = sand.u32 %s34, 1
        %s507 = scalar_lea.sflag [#allocation10], %s506
        %s508 = sand.u32 %s120, 1
        %s509 = smul.addr %s508, 8
        %s510 = scalar_lea.vmem [#allocation9], %s509
        %p511 = pneg %p133
        %p512 = pneg %p130
        %p513 = pneg %p154
        %p514 = pneg %p151
        %p515 = pneg %p175
        %p516 = pneg %p172
        %p517 = pneg %p196
        %p518 = pneg %p193
        %p519 = pneg %p217
        %p520 = pneg %p214
        %p521 = pneg %p238
        %p522 = pneg %p235
        %p523 = pneg %p264
        %p524 = pneg %p261
        %s525 = sand.u32 %s251, 1
        %s526 = scalar_lea.sflag [#allocation5], %s525
        %s527 = sand.u32 %s251, 1
        %s528 = smul.addr %s527, 8
        %s529 = scalar_lea.vmem [#allocation17], %s528
        %v530 = vld [vmem:[%s429] sm:$0xff]
        %v531 = vld [vmem:[%s439] sm:$0xff]
        %v532 = vld [vmem:[%s449] sm:$0xff]
        %v533 = vld [vmem:[%s459] sm:$0xff]
        %v534 = vld [vmem:[#allocation11] sm:$0xff]
        %v535 = vld [vmem:[#allocation11 + $0x8] sm:$0xff]
        %v536 = vld [vmem:[#allocation11 + $0x10] sm:$0xff]
        %v537 = vld [vmem:[#allocation11 + $0x18] sm:$0xff]
        %vm538 = vcmask 261120
        %v540 = vsel %vm538, %v530, 0
        %542 = vmatpush.msra.mxu0 0.0
        %543 = vmatpush.msra.mxu0 0.0
        %544 = vmatpush.msra.mxu0 0.0
        %545 = vmatpush.msra.mxu0 0.0
        %546 = vmatpush.msra.mxu0 0.0
        %547 = vmatpush.msra.mxu0 0.0
        %548 = vmatpush.msra.mxu0 0.0
        %549 = vmatpush.msra.mxu0 0.0
        %550 = vmatpush.msra.mxu0 0.0
        %551 = vmatpush.msra.mxu0 0.0
        %552 = vmatpush.msra.mxu0 0.0
        %553 = vmatpush.msra.mxu0 0.0
        %554 = vmatpush.msra.mxu0 %v537
        %555 = vmatpush.msra.mxu0 %v536
        %556 = vmatpush.msra.mxu0 %v535
        %557 = vmatpush.msra.mxu0 %v534
        %558 = vmatmul.f32.gmra.mxu0 %v540
        %v559 = vpop.f32.mrf.mxu0
        %v560 = vadd.f32 0.0, %v559
        %561 = vdwg.mxu0
        %v562 = vld [vmem:[#allocation12] sm:$0xff]
        %v563 = vld [vmem:[#allocation12 + $0x8] sm:$0xff]
        %v564 = vld [vmem:[#allocation12 + $0x10] sm:$0xff]
        %v565 = vld [vmem:[#allocation12 + $0x18] sm:$0xff]
        %v567 = vsel %vm538, %v531, 0
        %569 = vmatpush.msra.mxu0 0.0
        %570 = vmatpush.msra.mxu0 0.0
        %571 = vmatpush.msra.mxu0 0.0
        %572 = vmatpush.msra.mxu0 0.0
        %573 = vmatpush.msra.mxu0 0.0
        %574 = vmatpush.msra.mxu0 0.0
        %575 = vmatpush.msra.mxu0 0.0
        %576 = vmatpush.msra.mxu0 0.0
        %577 = vmatpush.msra.mxu0 0.0
        %578 = vmatpush.msra.mxu0 0.0
        %579 = vmatpush.msra.mxu0 0.0
        %580 = vmatpush.msra.mxu0 0.0
        %581 = vmatpush.msra.mxu0 %v565
        %582 = vmatpush.msra.mxu0 %v564
        %583 = vmatpush.msra.mxu0 %v563
        %584 = vmatpush.msra.mxu0 %v562
        %585 = vmatmul.f32.gmra.mxu0 %v567
        %v586 = vpop.f32.mrf.mxu0
        %v587 = vadd.f32 0.0, %v586
        %588 = vdwg.mxu0
        %v589 = vsel %vm538, %v532, 0.0
        %v590 = vrot.slane %v589, 4
        %v591 = vadd.f32 %v589, %v590
        %v592 = vrot.slane %v591, 2
        %v593 = vadd.f32 %v591, %v592
        %v594 = vrot.slane %v593, 1
        %v595 = vadd.f32 %v593, %v594
        %v596 = vld [vmem:[#allocation14] sm:$0xff]
        %v597 = vld [vmem:[#allocation14 + $0x8] sm:$0xff]
        %v598 = vld [vmem:[#allocation14 + $0x10] sm:$0xff]
        %v599 = vld [vmem:[#allocation14 + $0x18] sm:$0xff]
        %v601 = vsel %vm538, %v595, 0
        %603 = vmatpush.msra.mxu0 0.0
        %604 = vmatpush.msra.mxu0 0.0
        %605 = vmatpush.msra.mxu0 0.0
        %606 = vmatpush.msra.mxu0 0.0
        %607 = vmatpush.msra.mxu0 0.0
        %608 = vmatpush.msra.mxu0 0.0
        %609 = vmatpush.msra.mxu0 0.0
        %610 = vmatpush.msra.mxu0 0.0
        %611 = vmatpush.msra.mxu0 0.0
        %612 = vmatpush.msra.mxu0 0.0
        %613 = vmatpush.msra.mxu0 0.0
        %614 = vmatpush.msra.mxu0 0.0
        %615 = vmatpush.msra.mxu0 %v599
        %616 = vmatpush.msra.mxu0 %v598
        %617 = vmatpush.msra.mxu0 %v597
        %618 = vmatpush.msra.mxu0 %v596
        %619 = vmatmul.f32.gmra.mxu0 %v601
        %v620 = vpop.f32.mrf.mxu0
        %v621 = vadd.f32 0.0, %v620
        %622 = vdwg.mxu0
        %vm623 = vcmask 64512
        %v625 = vsel %vm623, %v560, 0
        %v628 = vsel %vm623, %v587, 0
        %630 = vmatpush.xpose.msra.mxu0 0.0
        %631 = vmatpush.xpose.msra.mxu0 0.0
        %632 = vmatpush.xpose.msra.mxu0 0.0
        %633 = vmatpush.xpose.msra.mxu0 0.0
        %634 = vmatpush.xpose.msra.mxu0 0.0
        %635 = vmatpush.xpose.msra.mxu0 0.0
        %636 = vmatpush.xpose.msra.mxu0 0.0
        %637 = vmatpush.xpose.msra.mxu0 0.0
        %638 = vmatpush.xpose.msra.mxu0 0.0
        %639 = vmatpush.xpose.msra.mxu0 0.0
        %640 = vmatpush.xpose.msra.mxu0 0.0
        %641 = vmatpush.xpose.msra.mxu0 0.0
        %642 = vmatpush.xpose.msra.mxu0 0.0
        %643 = vmatpush.xpose.msra.mxu0 0.0
        %644 = vmatpush.xpose.msra.mxu0 0.0
        %645 = vmatpush.xpose.msra.mxu0 %v628
        %646 = vmatmul.f32.gmra.mxu0 %v625
        %v647 = vpop.f32.mrf.mxu0
        %v648 = vadd.f32 %v533, %v647
        %649 = vdwg.mxu0
        %v650 = vsel %vm623, %v648, -inf
        %651 = vmax.xlane.f32.xlu0 %v650
        %v652 = vpop.xlane.xlu0 %651
        %v653 = vsub.f32 %v648, %v652
        %v654 = vmul.f32 %v653, 1.442695
        %v655 = vpow.pop %v654
        %v656 = vsel %vm623, %v655, 0.0
        %657 = vadd.xlane.f32.xlu0 %v656
        %v658 = vpop.xlane.xlu0 %657
        %v659 = vrcp.pop %v658
        %v660 = vmul.f32 %v658, %v659
        %v661 = vsub.f32 1.0, %v660
        %v662 = vmul.f32 %v659, %v661
        %v663 = vadd.f32 %v659, %v662
        %vm664 = vweird.f32 %v658
        %vm665 = vweird.f32 %v659
        %vm666 = vmor %vm664, %vm665
        %v667 = vsel %vm666, %v659, %v663
        %v668 = vand.u32 2147483647, %v658
        %vm669 = vcmp.eq.f32.partialorder %v668, 8.507059e+37
        %v670 = vand.u32 %v658, 2147483648
        %v671 = vor.u32 1.1754944e-38, %v670
        %v672 = vsel %vm669, %v671, %v667
        %v673 = vmul.f32 %v655, %v672
        %v674 = vsel %vm623, %v673, 0.0
        %675 = vadd.xlane.f32.xlu0 %v674
        %v676 = vpop.xlane.xlu0 %675
        %v677 = vperm.slane %v621, 0
        %v678 = vmul.f32 %v676, %v677
        %679 = vst.msk [vmem:[#allocation2] sm:$0xff] %vm623, %v678
        %680 = vrot.lane.b32.xlu0 %v560, 120
        %v681 = vpop.permute.xlu0 %680
        %682 = vrot.lane.b32.xlu0 %v587, 120
        %v683 = vpop.permute.xlu0 %682
        %v684 = vsel %vm623, %v681, 0
        %v686 = vsel %vm623, %v683, 0
        %688 = vmatpush.xpose.msra.mxu0 0.0
        %689 = vmatpush.xpose.msra.mxu0 0.0
        %690 = vmatpush.xpose.msra.mxu0 0.0
        %691 = vmatpush.xpose.msra.mxu0 0.0
        %692 = vmatpush.xpose.msra.mxu0 0.0
        %693 = vmatpush.xpose.msra.mxu0 0.0
        %694 = vmatpush.xpose.msra.mxu0 0.0
        %695 = vmatpush.xpose.msra.mxu0 0.0
        %696 = vmatpush.xpose.msra.mxu0 0.0
        %697 = vmatpush.xpose.msra.mxu0 0.0
        %698 = vmatpush.xpose.msra.mxu0 0.0
        %699 = vmatpush.xpose.msra.mxu0 0.0
        %700 = vmatpush.xpose.msra.mxu0 0.0
        %701 = vmatpush.xpose.msra.mxu0 0.0
        %702 = vmatpush.xpose.msra.mxu0 0.0
        %703 = vmatpush.xpose.msra.mxu0 %v686
        %704 = vmatmul.f32.gmra.mxu0 %v684
        %v705 = vpop.f32.mrf.mxu0
        %v706 = vadd.f32 %v533, %v705
        %707 = vdwg.mxu0
        %v708 = vsel %vm623, %v706, -inf
        %709 = vmax.xlane.f32.xlu0 %v708
        %v710 = vpop.xlane.xlu0 %709
        %v711 = vsub.f32 %v706, %v710
        %v712 = vmul.f32 %v711, 1.442695
        %v713 = vpow.pop %v712
        %v714 = vsel %vm623, %v713, 0.0
        %715 = vadd.xlane.f32.xlu0 %v714
        %v716 = vpop.xlane.xlu0 %715
        %v717 = vrcp.pop %v716
        %v718 = vmul.f32 %v716, %v717
        %v719 = vsub.f32 1.0, %v718
        %v720 = vmul.f32 %v717, %v719
        %v721 = vadd.f32 %v717, %v720
        %vm722 = vweird.f32 %v716
        %vm723 = vweird.f32 %v717
        %vm724 = vmor %vm722, %vm723
        %v725 = vsel %vm724, %v717, %v721
        %v726 = vand.u32 2147483647, %v716
        %vm727 = vcmp.eq.f32.partialorder %v726, 8.507059e+37
        %v728 = vand.u32 %v716, 2147483648
        %v729 = vor.u32 1.1754944e-38, %v728
        %v730 = vsel %vm727, %v729, %v725
        %v731 = vmul.f32 %v713, %v730
        %v732 = vsel %vm623, %v731, 0.0
        %733 = vadd.xlane.f32.xlu0 %v732
        %v734 = vpop.xlane.xlu0 %733
        %v735 = vmul.f32 %v734, %v677
        %vm736 = vcmask 130112
        %737 = vst.msk [vmem:[#allocation2] sm:$0xff] %vm736, %v735
        %738 = vrot.lane.b32.xlu0 %v560, 112
        %v739 = vpop.permute.xlu0 %738
        %740 = vrot.lane.b32.xlu0 %v587, 112
        %v741 = vpop.permute.xlu0 %740
        %v742 = vsel %vm623, %v739, 0
        %v744 = vsel %vm623, %v741, 0
        %746 = vmatpush.xpose.msra.mxu0 0.0
        %747 = vmatpush.xpose.msra.mxu0 0.0
        %748 = vmatpush.xpose.msra.mxu0 0.0
        %749 = vmatpush.xpose.msra.mxu0 0.0
        %750 = vmatpush.xpose.msra.mxu0 0.0
        %751 = vmatpush.xpose.msra.mxu0 0.0
        %752 = vmatpush.xpose.msra.mxu0 0.0
        %753 = vmatpush.xpose.msra.mxu0 0.0
        %754 = vmatpush.xpose.msra.mxu0 0.0
        %755 = vmatpush.xpose.msra.mxu0 0.0
        %756 = vmatpush.xpose.msra.mxu0 0.0
        %757 = vmatpush.xpose.msra.mxu0 0.0
        %758 = vmatpush.xpose.msra.mxu0 0.0
        %759 = vmatpush.xpose.msra.mxu0 0.0
        %760 = vmatpush.xpose.msra.mxu0 0.0
        %761 = vmatpush.xpose.msra.mxu0 %v744
        %762 = vmatmul.f32.gmra.mxu0 %v742
        %v763 = vpop.f32.mrf.mxu0
        %v764 = vadd.f32 %v533, %v763
        %765 = vdwg.mxu0
        %v766 = vsel %vm623, %v764, -inf
        %767 = vmax.xlane.f32.xlu0 %v766
        %v768 = vpop.xlane.xlu0 %767
        %v769 = vsub.f32 %v764, %v768
        %v770 = vmul.f32 %v769, 1.442695
        %v771 = vpow.pop %v770
        %v772 = vsel %vm623, %v771, 0.0
        %773 = vadd.xlane.f32.xlu0 %v772
        %v774 = vpop.xlane.xlu0 %773
        %v775 = vrcp.pop %v774
        %v776 = vmul.f32 %v774, %v775
        %v777 = vsub.f32 1.0, %v776
        %v778 = vmul.f32 %v775, %v777
        %v779 = vadd.f32 %v775, %v778
        %vm780 = vweird.f32 %v774
        %vm781 = vweird.f32 %v775
        %vm782 = vmor %vm780, %vm781
        %v783 = vsel %vm782, %v775, %v779
        %v784 = vand.u32 2147483647, %v774
        %vm785 = vcmp.eq.f32.partialorder %v784, 8.507059e+37
        %v786 = vand.u32 %v774, 2147483648
        %v787 = vor.u32 1.1754944e-38, %v786
        %v788 = vsel %vm785, %v787, %v783
        %v789 = vmul.f32 %v771, %v788
        %v790 = vsel %vm623, %v789, 0.0
        %791 = vadd.xlane.f32.xlu0 %v790
        %v792 = vpop.xlane.xlu0 %791
        %v793 = vmul.f32 %v792, %v677
        %vm794 = vcmask 195712
        %795 = vst.msk [vmem:[#allocation2] sm:$0xff] %vm794, %v793
        %796 = vrot.lane.b32.xlu0 %v560, 104
        %v797 = vpop.permute.xlu0 %796
        %798 = vrot.lane.b32.xlu0 %v587, 104
        %v799 = vpop.permute.xlu0 %798
        %v800 = vsel %vm623, %v797, 0
        %v802 = vsel %vm623, %v799, 0
        %804 = vmatpush.xpose.msra.mxu0 0.0
        %805 = vmatpush.xpose.msra.mxu0 0.0
        %806 = vmatpush.xpose.msra.mxu0 0.0
        %807 = vmatpush.xpose.msra.mxu0 0.0
        %808 = vmatpush.xpose.msra.mxu0 0.0
        %809 = vmatpush.xpose.msra.mxu0 0.0
        %810 = vmatpush.xpose.msra.mxu0 0.0
        %811 = vmatpush.xpose.msra.mxu0 0.0
        %812 = vmatpush.xpose.msra.mxu0 0.0
        %813 = vmatpush.xpose.msra.mxu0 0.0
        %814 = vmatpush.xpose.msra.mxu0 0.0
        %815 = vmatpush.xpose.msra.mxu0 0.0
        %816 = vmatpush.xpose.msra.mxu0 0.0
        %817 = vmatpush.xpose.msra.mxu0 0.0
        %818 = vmatpush.xpose.msra.mxu0 0.0
        %819 = vmatpush.xpose.msra.mxu0 %v802
        %820 = vmatmul.f32.gmra.mxu0 %v800
        %v821 = vpop.f32.mrf.mxu0
        %v822 = vadd.f32 %v533, %v821
        %823 = vdwg.mxu0
        %v824 = vsel %vm623, %v822, -inf
        %825 = vmax.xlane.f32.xlu0 %v824
        %v826 = vpop.xlane.xlu0 %825
        %v827 = vsub.f32 %v822, %v826
        %v828 = vmul.f32 %v827, 1.442695
        %v829 = vpow.pop %v828
        %v830 = vsel %vm623, %v829, 0.0
        %831 = vadd.xlane.f32.xlu0 %v830
        %v832 = vpop.xlane.xlu0 %831
        %v833 = vrcp.pop %v832
        %v834 = vmul.f32 %v832, %v833
        %v835 = vsub.f32 1.0, %v834
        %v836 = vmul.f32 %v833, %v835
        %v837 = vadd.f32 %v833, %v836
        %vm838 = vweird.f32 %v832
        %vm839 = vweird.f32 %v833
        %vm840 = vmor %vm838, %vm839
        %v841 = vsel %vm840, %v833, %v837
        %v842 = vand.u32 2147483647, %v832
        %vm843 = vcmp.eq.f32.partialorder %v842, 8.507059e+37
        %v844 = vand.u32 %v832, 2147483648
        %v845 = vor.u32 1.1754944e-38, %v844
        %v846 = vsel %vm843, %v845, %v841
        %v847 = vmul.f32 %v829, %v846
        %v848 = vsel %vm623, %v847, 0.0
        %849 = vadd.xlane.f32.xlu0 %v848
        %v850 = vpop.xlane.xlu0 %849
        %v851 = vmul.f32 %v850, %v677
        %vm852 = vcmask 261312
        %853 = vst.msk [vmem:[#allocation2] sm:$0xff] %vm852, %v851
        %v854 = vld [vmem:[#allocation2] sm:$0xff]
        %v855 = vld [vmem:[#allocation15] sm:$0xff]
        %v856 = vld [vmem:[#allocation15 + $0x8] sm:$0xff]
        %v857 = vld [vmem:[#allocation15 + $0x10] sm:$0xff]
        %v858 = vld [vmem:[#allocation15 + $0x18] sm:$0xff]
        %v859 = vld [vmem:[%s8] sm:$0x1]
        %v861 = vperm.slane %v859, 0
        %v864 = vsel %vm538, %v854, 0
        %866 = vmatpush.msra.mxu0 0.0
        %867 = vmatpush.msra.mxu0 0.0
        %868 = vmatpush.msra.mxu0 0.0
        %869 = vmatpush.msra.mxu0 0.0
        %870 = vmatpush.msra.mxu0 0.0
        %871 = vmatpush.msra.mxu0 0.0
        %872 = vmatpush.msra.mxu0 0.0
        %873 = vmatpush.msra.mxu0 0.0
        %874 = vmatpush.msra.mxu0 0.0
        %875 = vmatpush.msra.mxu0 0.0
        %876 = vmatpush.msra.mxu0 0.0
        %877 = vmatpush.msra.mxu0 0.0
        %878 = vmatpush.msra.mxu0 %v858
        %879 = vmatpush.msra.mxu0 %v857
        %880 = vmatpush.msra.mxu0 %v856
        %881 = vmatpush.msra.mxu0 %v855
        %882 = vmatmul.f32.gmra.mxu0 %v864
        %v883 = vpop.f32.mrf.mxu0
        %v884 = vadd.f32 %v861, %v883
        %885 = vdwg.mxu0
        %886 = vst.msk [vmem:[%s529] sm:$0xff] %vm538, %v884
        %s887 = sand.u32 %s251, 1
        %s888 = scalar_lea.sflag [#allocation5], %s887
        %s889 = sand.u32 %s251, 1
        %s890 = smul.addr %s889, 8
        %s891 = scalar_lea.vmem [#allocation17], %s890
        // Predicated region
        $region89: #{tpu_custom_call.1} parent=55 // pred_check
          %p892 = pneg %p261
        $region90: #{tpu_custom_call.1} parent=55 // pred_check_branch
          %894 = sbr.rel (%p892) target = $region92
        $region91: #{tpu_custom_call.1} parent=55 // pred_region
          %896 = vsyncadd %s888, 0
          %s897 = smul.addr %s34, 8
          %s898 = scalar_lea.hbm %s9, %s897
          %s900 = sshll.u32 %s891, 4
          %s901 = int_to_ptr.vmem [resolvable:$true] %s900
          %s902 = sshll.u32 %s898, 4
          %s903 = int_to_ptr.hbm [resolvable:$true] %s902
          %905 = dma.vmem_to_hbm [thread:$0]  %s901, 128, %s903, %s888
        $region92: #{tpu_custom_call.1} parent=55 // pred_fallthru
          _
      $region56: #{tpu_custom_call.1} parent=5 // pred_fallthru
        _
      %p906 = scmp.le.s32.totalorder 2, %s29
      // Predicated region
      $region93: #{tpu_custom_call.1} parent=5 // pred_check
        %p907 = pneg %p906
      $region94: #{tpu_custom_call.1} parent=5 // pred_check_branch
        %909 = sbr.rel (%p907) target = $region96
      $region95: #{tpu_custom_call.1} parent=5 // pred_region
        %s910 = ssub.s32 %s29, 2
        // Predicated region
        $region97: #{tpu_custom_call.1} parent=95 // pred_check
          %p911 = pneg %p267
        $region98: #{tpu_custom_call.1} parent=95 // pred_check_branch
          %913 = sbr.rel (%p911) target = $region100
        $region99: #{tpu_custom_call.1} parent=95 // pred_region
          %s914 = sand.u32 %s252, 1
          %s915 = scalar_lea.sflag [#allocation5], %s914
          %s916 = sand.u32 %s252, 1
          %s917 = smul.addr %s916, 8
          %s918 = scalar_lea.vmem [#allocation17], %s917
          %920 = dma.done %s915, 128
        $region100: #{tpu_custom_call.1} parent=95 // pred_fallthru
          _
      $region96: #{tpu_custom_call.1} parent=5 // pred_fallthru
        _
    $region6: #{tpu_custom_call.1} parent=1 // loop_footer
      %s33 = sadd.s32 1, %s29
    $region7: #{tpu_custom_call.1} parent=1 // loop_footer_branch
      %28 = sbr.rel target = $region3
    $region8: #{tpu_custom_call.1} parent=1 // loop_exit
      _
    %921 = vsyncpa [#allocation4], 1
    %s922 = scalar_lea.sflag [#allocation4], 1
    %923 = vsyncpa %s922, 1
    %924 = vsyncpa [#allocation7], 1
    %s925 = scalar_lea.sflag [#allocation7], 1
    %926 = vsyncpa %s925, 1
    %927 = vsyncpa [#allocation10], 1
    %s928 = scalar_lea.sflag [#allocation10], 1
    %929 = vsyncpa %s928, 1
    %930 = vsyncpa [#allocation13], 1
    %931 = vsyncpa [#allocation16], 1
    %932 = vsyncpa [#allocation5], 1
    %s933 = scalar_lea.sflag [#allocation5], 1
    %934 = vsyncpa %s933, 1

</llo_original>
